<compile_context>
chip_gen: v5e
topology: v5e:2x2
jax: 0.10.0
libtpu: 0.0.40
codegen_flags: <defaults>
</compile_context>

<pallas_src>
import jax
import jax.numpy as jnp
from jax.experimental import pallas as pl
from jax.experimental.pallas import tpu as pltpu

BN_EPS = 1e-5


# --------------------------------------------------------------------------- #
# Pass 0: g = Wg @ x   (channels-first, lane-dense column tiles)
# --------------------------------------------------------------------------- #
def _snl_g_kernel(x_ref, wgt_ref, g_ref):
    # x_ref: (1, Cin, TC) f32, wgt_ref: (Cp, Cin) f32, g_ref: (1, Cp, TC) f32
    g_ref[0] = jnp.dot(wgt_ref[...], x_ref[0], preferred_element_type=jnp.float32)


# --------------------------------------------------------------------------- #
# Pass 1: s = W1 g + W2 (att @ g), tiled over (batch, att rows, att columns),
#         plus per-(batch, row-tile) BatchNorm partial statistics.
# --------------------------------------------------------------------------- #
def _snl_main_kernel(att_ref, gk_ref, gi_ref, w1t_ref, w2t_ref,
                     s_ref, ssum_ref, ssq_ref, acc_ref):
    """Blocks:
      att_ref : (1, TN, TK)    att row/column tile (bf16 or f32)
      gk_ref  : (1, Cp, TK)    g columns matching the contraction tile (f32)
      gi_ref  : (1, Cp, TN)    g columns matching the row tile (f32, w_1 branch)
      w1t_ref : (Cin, Cp)      w_1 weight, pre-transposed
      w2t_ref : (Cin, Cp)      w_2 weight, pre-transposed
      s_ref   : (1, Cin, TN)   pre-BN activation tile (output, bf16/f32)
      ssum_ref: (1, 1, Cin, 1) per-tile per-channel sum (output, f32)
      ssq_ref : (1, 1, Cin, 1) per-tile per-channel sum of squares (output, f32)
      acc_ref : (Cp, TN)       VMEM accumulator for att @ g over column tiles
    """
    k = pl.program_id(2)

    @pl.when(k == 0)
    def _init():
        acc_ref[...] = jnp.zeros_like(acc_ref)

    # Dominant op: ag[p, n] += sum_m g[p, m] * att[n, m]  (contraction over the
    # lane dim of both operands -> lane-dense (Cp, TN) result, f32 accumulate).
    att = att_ref[0]
    lhs = gk_ref[0].astype(att.dtype)          # bf16 MXU path when att is bf16
    acc_ref[...] += jax.lax.dot_general(lhs, att, (((1,), (1,)), ((), ())),
                                        preferred_element_type=jnp.float32)

    @pl.when(k == pl.num_programs(2) - 1)
    def _finalize():
        g_i = gi_ref[0]                                                # (Cp, TN)
        s = (jnp.dot(w1t_ref[...], g_i, preferred_element_type=jnp.float32)
             + jnp.dot(w2t_ref[...], acc_ref[...],
                       preferred_element_type=jnp.float32))            # (C, TN)
        s_ref[0] = s.astype(s_ref.dtype)
        # BatchNorm partial stats from the f32 s (before any bf16 cast).
        ssum_ref[0, 0] = jnp.sum(s, axis=1, keepdims=True)             # (C, 1)
        ssq_ref[0, 0] = jnp.sum(s * s, axis=1, keepdims=True)          # (C, 1)


# --------------------------------------------------------------------------- #
# Pass 2: out = relu(s * scale + shift) + x     (BN folded into scale/shift)
# --------------------------------------------------------------------------- #
def _snl_bn_relu_kernel(s_ref, x_ref, scale_ref, shift_ref, out_ref):
    s = s_ref[0].astype(jnp.float32)           # (Cin, TC)
    x = x_ref[0]                               # (Cin, TC) f32
    out_ref[0] = jnp.maximum(s * scale_ref[...] + shift_ref[...], 0.0) + x


# --------------------------------------------------------------------------- #
# Tiling helpers (generation-aware)
# --------------------------------------------------------------------------- #
def _vmem_budgets():
    """(att per-buffer byte budget, vmem_limit_bytes) for the current chip."""
    try:
        cap = getattr(pltpu.get_tpu_info(), "vmem_capacity_bytes", 128 << 20)
    except Exception:
        cap = 128 << 20
    if cap <= (64 << 20):                 # v7x: 64 MiB per TensorCore -> tight
        return 6 << 20, 40 << 20
    return 20 << 20, 96 << 20             # v5e / v6e: 128 MiB -> go big


def _largest_divisor(n, max_val, quantum=128):
    """Largest divisor of n that is a multiple of `quantum` and <= max_val.
    Returns n itself (full-extent block, always legal) if n <= max_val or no
    aligned divisor exists."""
    if n <= max_val:
        return n
    d = (min(n, max_val) // quantum) * quantum
    while d >= quantum:
        if n % d == 0:
            return d
        d -= quantum
    # TODO(synk): N with no 128-aligned divisor falls back to a full-extent
    # block; very large such N would need masked/ragged tiling.
    return n


def _pick_att_tiles(n, itemsize, max_tile_bytes):
    """(row tile, contraction tile) for the (N, N) att matrix so one (tn, tk)
    block stays within max_tile_bytes."""
    budget = max(max_tile_bytes // max(itemsize, 1), 128 * 128)
    if n % 128 != 0 or n * 128 <= budget:
        tk = n                              # whole contraction in one step
    else:
        tk = _largest_divisor(n, max(budget // 512, 128))
    tn = _largest_divisor(n, max(budget // tk, 128))
    return tn, tk


# --------------------------------------------------------------------------- #
# Wrapper
# --------------------------------------------------------------------------- #
def snl_unit(x_ncdhw, att, wg, w1, w2, gamma, beta, *, bn_eps=BN_EPS,
             att_dtype=jnp.bfloat16, s_dtype=jnp.bfloat16,
             row_tile=None, k_tile=None, col_tile=None):
    """SNLUnit forward.

    x_ncdhw : (B, Cin, T, H, W) float32
    att     : (B, N, N) with N = T*H*W (cast to `att_dtype`, default bf16)
    wg      : (Cin, Cp)  -- transpose of the PyTorch Conv3d `g` weight
    w1, w2  : (Cp, Cin)  -- transposes of the PyTorch Conv3d `w_1`/`w_2` weights
    gamma, beta : (Cin,) BatchNorm3d affine parameters
    """
    B, C, T, H, W = x_ncdhw.shape
    N = T * H * W
    Cp = wg.shape[1]

    x_cf = jnp.asarray(x_ncdhw, jnp.float32).reshape(B, C, N)   # channels-first
    att = jnp.asarray(att).reshape(B, N, N).astype(att_dtype)
    wgt = jnp.asarray(wg, jnp.float32).T                         # (Cp, C)
    w1t = jnp.asarray(w1, jnp.float32).T                         # (C, Cp)
    w2t = jnp.asarray(w2, jnp.float32).T                         # (C, Cp)
    gamma = jnp.asarray(gamma, jnp.float32).reshape(C)
    beta = jnp.asarray(beta, jnp.float32).reshape(C)

    max_tile_bytes, vmem_limit = _vmem_budgets()
    tn, tk = _pick_att_tiles(N, att.dtype.itemsize, max_tile_bytes)
    if row_tile is not None:
        tn = row_tile
    if k_tile is not None:
        tk = k_tile
    tcol = col_tile if col_tile is not None else _largest_divisor(
        N, max(128, (4 << 20) // (max(C, Cp) * 4)))
    assert N % tn == 0 and N % tk == 0 and N % tcol == 0, (N, tn, tk, tcol)
    nt, nk, nc = N // tn, N // tk, N // tcol

    ew_params = pltpu.CompilerParams(
        dimension_semantics=("parallel", "parallel"),
        vmem_limit_bytes=vmem_limit)
    main_params = pltpu.CompilerParams(
        # Shard only the batch axis across TensorCores; row/contraction axes
        # stay sequential so the per-batch g blocks / accumulator are reused.
        dimension_semantics=("parallel", "arbitrary", "arbitrary"),
        vmem_limit_bytes=vmem_limit)

    # --- pass 0: g = Wg @ x (tiny channel matmul, done once per voxel) --------
    g = pl.pallas_call(
        _snl_g_kernel,
        out_shape=jax.ShapeDtypeStruct((B, Cp, N), jnp.float32),
        grid=(B, nc),
        in_specs=[
            pl.BlockSpec((1, C, tcol), lambda b, j: (b, 0, j)),
            pl.BlockSpec((Cp, C), lambda b, j: (0, 0)),
        ],
        out_specs=pl.BlockSpec((1, Cp, tcol), lambda b, j: (b, 0, j)),
        compiler_params=ew_params,
    )(x_cf, wgt)

    # --- pass 1: s = W1 g + W2 (att @ g), tiled, + partial BN stats -----------
    main_cost = pl.CostEstimate(
        flops=int(2 * B * N * N * Cp + 4 * B * N * C * Cp),
        transcendentals=0,
        bytes_accessed=int(att.size * att.dtype.itemsize
                           + 2 * B * Cp * N * 4
                           + B * C * N * jnp.dtype(s_dtype).itemsize),
    )
    s, ssum, ssq = pl.pallas_call(
        _snl_main_kernel,
        out_shape=(
            jax.ShapeDtypeStruct((B, C, N), s_dtype),
            jax.ShapeDtypeStruct((B, nt, C, 1), jnp.float32),
            jax.ShapeDtypeStruct((B, nt, C, 1), jnp.float32),
        ),
        grid=(B, nt, nk),
        in_specs=[
            pl.BlockSpec((1, tn, tk), lambda b, i, k: (b, i, k)),   # att tile
            pl.BlockSpec((1, Cp, tk), lambda b, i, k: (b, 0, k)),   # g (bmm rhs)
            pl.BlockSpec((1, Cp, tn), lambda b, i, k: (b, 0, i)),   # g (w_1 branch)
            pl.BlockSpec((C, Cp), lambda b, i, k: (0, 0)),          # w1^T
            pl.BlockSpec((C, Cp), lambda b, i, k: (0, 0)),          # w2^T
        ],
        out_specs=(
            pl.BlockSpec((1, C, tn), lambda b, i, k: (b, 0, i)),
            pl.BlockSpec((1, 1, C, 1), lambda b, i, k: (b, i, 0, 0)),
            pl.BlockSpec((1, 1, C, 1), lambda b, i, k: (b, i, 0, 0)),
        ),
        scratch_shapes=[pltpu.VMEM((Cp, tn), jnp.float32)],
        compiler_params=main_params,
        cost_estimate=main_cost,
    )(att, g, g, w1t, w2t)

    # --- combine the tiny per-tile stats and fold BN into scale/shift ---------
    count = jnp.float32(B * N)
    ssum_c = jnp.sum(ssum, axis=(0, 1)).reshape(C)
    ssq_c = jnp.sum(ssq, axis=(0, 1)).reshape(C)
    mean = ssum_c / count
    # NOTE: E[s^2]-E[s]^2 in f32 (clamped); switch to a Welford-style combine if
    # |mean| >> std ever matters for this module.
    var = jnp.maximum(ssq_c / count - mean * mean, 0.0)               # biased var
    inv = jax.lax.rsqrt(var + bn_eps)
    scale = (gamma * inv).reshape(C, 1)
    shift = (beta - mean * gamma * inv).reshape(C, 1)

    # --- pass 2: out = relu(BN(s)) + x  (HBM-streaming, big lane-dense tiles) -
    out_cf = pl.pallas_call(
        _snl_bn_relu_kernel,
        out_shape=jax.ShapeDtypeStruct((B, C, N), jnp.float32),
        grid=(B, nc),
        in_specs=[
            pl.BlockSpec((1, C, tcol), lambda b, j: (b, 0, j)),   # s
            pl.BlockSpec((1, C, tcol), lambda b, j: (b, 0, j)),   # x (residual)
            pl.BlockSpec((C, 1), lambda b, j: (0, 0)),            # scale
            pl.BlockSpec((C, 1), lambda b, j: (0, 0)),            # shift
        ],
        out_specs=pl.BlockSpec((1, C, tcol), lambda b, j: (b, 0, j)),
        compiler_params=ew_params,
        cost_estimate=pl.CostEstimate(
            flops=int(3 * B * C * N), transcendentals=0,
            bytes_accessed=int(B * C * N * (8 + jnp.dtype(s_dtype).itemsize))),
    )(s, x_cf, scale, shift)

    return out_cf.reshape(B, C, T, H, W)


# --------------------------------------------------------------------------- #
# Pure-JAX reference (follows the PyTorch forward order of operations, f32)
# --------------------------------------------------------------------------- #
def snl_unit_ref(x_ncdhw, att, wg, w1, w2, gamma, beta, *, bn_eps=BN_EPS):
    B, C, T, H, W = x_ncdhw.shape
    N = T * H * W
    hi = jax.lax.Precision.HIGHEST
    x_cl = jnp.transpose(x_ncdhw.reshape(B, C, N), (0, 2, 1)).astype(jnp.float32)
    att = att.reshape(B, N, N).astype(jnp.float32)
    g = jnp.einsum('bnc,cp->bnp', x_cl, wg, precision=hi)
    x1 = jnp.einsum('bnp,pc->bnc', g, w1, precision=hi)
    ag = jnp.einsum('bnm,bmp->bnp', att, g, precision=hi)
    x2 = jnp.einsum('bnp,pc->bnc', ag, w2, precision=hi)
    s = x1 + x2
    mean = jnp.mean(s, axis=(0, 1), keepdims=True)
    var = jnp.mean((s - mean) ** 2, axis=(0, 1), keepdims=True)
    normed = (s - mean) / jnp.sqrt(var + bn_eps) * gamma.reshape(1, 1, C) \
        + beta.reshape(1, 1, C)
    out = jnp.maximum(normed, 0.0) + x_cl
    return jnp.transpose(out, (0, 2, 1)).reshape(B, C, T, H, W)


if __name__ == "__main__":
    # Small shapes consistent with the module: inplanes=8, planes=4, N = 256.
    B, Cin, Cp = 2, 8, 4
    T, H, W = 4, 8, 8
    N = T * H * W

    key = jax.random.PRNGKey(0)
    kx, ka, kg, k1, k2 = jax.random.split(key, 5)

    x = jax.random.normal(kx, (B, Cin, T, H, W), dtype=jnp.float32)
    att = jax.random.normal(ka, (B, N, N), dtype=jnp.float32) * 0.1

    # Conv3d 1x1x1 weights (bias=False) as channel-mixing matrices:
    # PyTorch weight (out, in, 1, 1, 1) -> stored here as its transpose (in, out).
    wg = jax.random.normal(kg, (Cin, Cp), dtype=jnp.float32) * 0.2   # g  : in -> planes
    w1 = jax.random.normal(k1, (Cp, Cin), dtype=jnp.float32) * 0.2   # w_1: planes -> in
    w2 = jax.random.normal(k2, (Cp, Cin), dtype=jnp.float32) * 0.2   # w_2: planes -> in

    # BatchNorm3d affine params (default init: weight=1, bias=0).
    gamma = jnp.ones((Cin,), dtype=jnp.float32)
    beta = jnp.zeros((Cin,), dtype=jnp.float32)

    ref = snl_unit_ref(x, att, wg, w1, w2, gamma, beta)

    # Run 1: production defaults (bf16 att + bf16 s, auto generation-aware
    # tiles). Compared against the f32 reference with a bf16-appropriate
    # tolerance.
    out = snl_unit(x, att, wg, w1, w2, gamma, beta)
    out = jax.block_until_ready(out)
    assert out.shape == x.shape
    err_bf16 = float(jnp.max(jnp.abs(out - ref)))
    assert jnp.allclose(out, ref, rtol=5e-2, atol=5e-2), err_bf16

    # Run 2: full f32 with forced small tiles -> exercises the row-tiled /
    # contraction-tiled accumulator path and the stats combine; tight check.
    out32 = snl_unit(x, att, wg, w1, w2, gamma, beta,
                     att_dtype=jnp.float32, s_dtype=jnp.float32,
                     row_tile=128, k_tile=128, col_tile=128)
    out32 = jax.block_until_ready(out32)
    err_f32 = float(jnp.max(jnp.abs(out32 - ref)))
    assert jnp.allclose(out32, ref, rtol=5e-3, atol=5e-3), err_f32

    print("KERNEL_OK")
</pallas_src>

<mosaic_0001>
module attributes {stable_mosaic.version = 11 : i64} {
  func.func @_snl_g_kernel(%arg0: i32, %arg1: i32, %arg2: memref<1x8x256xf32, #tpu.memory_space<vmem>>, %arg3: memref<4x8xf32, #tpu.memory_space<vmem>>, %arg4: memref<1x4x256xf32, #tpu.memory_space<vmem>>) attributes {dimension_semantics = [#tpu.dimension_semantics<parallel>, #tpu.dimension_semantics<parallel>], iteration_bounds = array<i64: 2, 1>, scalar_prefetch = 0 : i64, scratch_operands = 0 : i64, tpu.core_type = #tpu.core_type<tc>, window_params = [{transform_indices = @transform_0, window_bounds = array<i64: 1, 8, 256>}, {pipeline_mode = #tpu.pipeline_mode<synchronous>, transform_indices = @transform_1, window_bounds = array<i64: 4, 8>}, {transform_indices = @transform_2, window_bounds = array<i64: 1, 4, 256>}]} {
    %c0 = arith.constant 0 : index
    %c0_0 = arith.constant 0 : index
    %0 = vector.load %arg3[%c0, %c0_0] : memref<4x8xf32, #tpu.memory_space<vmem>>, vector<4x8xf32>
    %c0_1 = arith.constant 0 : index
    %c0_2 = arith.constant 0 : index
    %c0_3 = arith.constant 0 : index
    %1 = vector.load %arg2[%c0_1, %c0_2, %c0_3] : memref<1x8x256xf32, #tpu.memory_space<vmem>>, vector<1x8x256xf32>
    %2 = vector.shape_cast %1 : vector<1x8x256xf32> to vector<8x256xf32>
    %cst = arith.constant dense<0.000000e+00> : vector<4x256xf32>
    %3 = tpu.matmul %0, %2, %cst {dimension_numbers = #tpu.dot_dimension_numbers<[1], [0], [0], [1], [0, 0, 1, 1], [], []>} : vector<4x8xf32>, vector<8x256xf32>, vector<4x256xf32> -> vector<4x256xf32>
    %c0_4 = arith.constant 0 : index
    %c0_5 = arith.constant 0 : index
    %c0_6 = arith.constant 0 : index
    %4 = vector.load %arg4[%c0_4, %c0_5, %c0_6] : memref<1x4x256xf32, #tpu.memory_space<vmem>>, vector<1x4x256xf32>
    %5 = vector.shape_cast %4 : vector<1x4x256xf32> to vector<4x256xf32>
    %6 = vector.shape_cast %3 : vector<4x256xf32> to vector<1x4x256xf32>
    tpu.vector_store %arg4[%c0_4, %c0_5, %c0_6], %6 {strides = array<i32>} : memref<1x4x256xf32, #tpu.memory_space<vmem>>, vector<1x4x256xf32>,
    return
  }
  func.func @transform_0(%arg0: i32, %arg1: i32) -> (i32, i32, i32) {
    %c0_i32 = arith.constant 0 : i32
    %c0_i32_0 = arith.constant 0 : i32
    return %arg0, %c0_i32, %arg1 : i32, i32, i32
  }
  func.func @transform_1(%arg0: i32, %arg1: i32) -> (i32, i32) {
    %c0_i32 = arith.constant 0 : i32
    %c0_i32_0 = arith.constant 0 : i32
    %c0_i32_1 = arith.constant 0 : i32
    return %c0_i32, %c0_i32_0 : i32, i32
  }
  func.func @transform_2(%arg0: i32, %arg1: i32) -> (i32, i32, i32) {
    %c0_i32 = arith.constant 0 : i32
    %c0_i32_0 = arith.constant 0 : i32
    return %arg0, %c0_i32, %arg1 : i32, i32, i32
  }
}

</mosaic_0001>

<llo_original>
// kernel: tpu_custom_call.1
$region0: #{tpu_custom_call.1}
  #allocation0 [shape = 'u32[]', space=smem, size = 0x4, offset = 0x4, fixed_abs, tag = 'smem constant byte address 0x4 - core index']
  #allocation1 [shape = 'u32[72,128]{1,0:T(1,128)}', space=vmem, size = 0x9000, scoped, tag = 'internal scratch']
  %s0 = inlined_call_operand.hbm [shape: f32[2,8,256], index: 0, kind: input, shape index: {}]
  %s1 = inlined_call_operand.hbm [shape: f32[4,8], index: 1, kind: input, shape index: {}]
  %s2 = inlined_call_operand.hbm [shape: f32[2,4,256], index: 2, kind: output, shape index: {}]
  %s3 = sld [smem:[#allocation0]]
  $region49: #{tpu_custom_call.1} parent=0
    _
  %s5 = ssub.s32 1, %s3
  %s6 = scalar_select 0, %s5, %s3
  $region1: #{tpu_custom_call.1} parent=0
    #allocation2 [shape = 'u8[16384]{0}', space=vmem, size = 0x4000, scoped, tag = 'input window, operand 0']
    #allocation3 [shape = 's32[2]{0}', space=sflag, size = 0x8, scoped, tag = 'scoped memory for tpu_custom_call.1']
    #allocation4 [shape = 's32[2]{0}', space=sflag, size = 0x8, scoped, tag = 'scoped memory for tpu_custom_call.1']
    #allocation5 [shape = 'u8[2048]{0}', space=vmem, size = 0x800, scoped, tag = 'input window, operand 1, single buffered']
    #allocation6 [shape = 's32[1]{0}', space=sflag, size = 0x4, scoped, tag = 'scoped memory for tpu_custom_call.1']
    #allocation7 [shape = 'u8[8192]{0}', space=vmem, size = 0x2000, scoped, tag = 'output window, operand 0']
    %7 = vsyncpa [#allocation3], 0
    %s8 = scalar_lea.sflag [#allocation3], 1
    %9 = vsyncpa %s8, 0
    %10 = vsyncpa [#allocation6], 0
    %11 = vsyncpa [#allocation4], 0
    %s12 = scalar_lea.sflag [#allocation4], 1
    %13 = vsyncpa %s12, 0
    loop: start=0, step=1, limit=4
    $region2: #{tpu_custom_call.1} parent=1 // loop_pre_header
      _
    $region3: #{tpu_custom_call.1} parent=1 // loop_header
      %s15 = sphi 0, %s19
      %p16 = scmp.ge.s32.totalorder %s15, 4
      %s22 = sphi 0, %s34
      %s23 = sphi 0, %s30
      %s24 = sphi 0, %s22
      %s25 = sphi 0, %s23
      %s26 = sphi 0, %s24
      %s27 = sphi 0, %s25
      %s39 = sphi 0, %s41
      %s42 = sphi 0, %s39
      %s43 = sphi 0, %s42
      %s59 = sphi 0, %s43
      %s63 = sphi 0, %s63
      %s65 = sphi 0, %s63
      %s66 = sphi 0, %s65
      %s80 = sphi 0, %s66
      %s88 = sphi 0, %s90
      %s91 = sphi 0, %s88
      %s92 = sphi 0, %s91
      %s108 = sphi 0, %s92
    $region4: #{tpu_custom_call.1} parent=1 // loop_header_branch
      %18 = sbr.rel (%p16) target = $region8
    $region5: #{tpu_custom_call.1} parent=1 // loop_body
      %s20 = ssub.s32 %s15, 1
      %s21 = ssub.s32 %s15, 2
      %s28 = sadd.s32 1, %s23
      %p29 = scmp.ge.s32.totalorder %s28, 1
      %s30 = scalar_select %p29, 0, %s28
      %s31 = sadd.s32 1, %s22
      %s32 = scalar_select %p29, %s31, %s22
      %p33 = scmp.ge.s32.totalorder %s32, 2
      %s34 = scalar_select %p33, 0, %s32
      %s35 = ssub.s32 %s22, %s34
      %s36 = ssub.s32 %s23, %s30
      %s37 = sor.u32 %s35, %s36
      %p38 = scmp.eq.s32.totalorder %s37, 0
      %s40 = sadd.s32 %s39, 1
      %s41 = scalar_select %p38, %s39, %s40
      %p44 = pneg %p38
      %p45 = scmp.eq.s32.totalorder %s15, 1
      %p46 = por %p44, %p45
      %p47 = scmp.ne.s32.totalorder %s39, %s42
      %p48 = scmp.eq.s32.totalorder %s15, 0
      %p49 = por %p47, %p48
      %p50 = scmp.ne.s32.totalorder %s39, %s42
      %p51 = scmp.eq.s32.totalorder %s20, 1
      %p52 = por %p50, %p51
      %p53 = scmp.ne.s32.totalorder %s42, %s43
      %p54 = scmp.eq.s32.totalorder %s20, 0
      %p55 = por %p53, %p54
      %p56 = scmp.ne.s32.totalorder %s42, %s43
      %p57 = scmp.eq.s32.totalorder %s21, 1
      %p58 = por %p56, %p57
      %p60 = scmp.ne.s32.totalorder %s43, %s59
      %p61 = scmp.eq.s32.totalorder %s21, 0
      %p62 = por %p60, %p61
      %s64 = sadd.s32 %s63, 1
      %p67 = scmp.eq.s32.totalorder %s15, 1
      %p68 = scmp.ne.s32.totalorder %s63, %s65
      %p69 = scmp.eq.s32.totalorder %s15, 0
      %p70 = por %p68, %p69
      %p71 = scmp.ne.s32.totalorder %s63, %s65
      %p72 = scmp.eq.s32.totalorder %s20, 1
      %p73 = por %p71, %p72
      %p74 = scmp.ne.s32.totalorder %s65, %s66
      %p75 = scmp.eq.s32.totalorder %s20, 0
      %p76 = por %p74, %p75
      %p77 = scmp.ne.s32.totalorder %s65, %s66
      %p78 = scmp.eq.s32.totalorder %s21, 1
      %p79 = por %p77, %p78
      %p81 = scmp.ne.s32.totalorder %s66, %s80
      %p82 = scmp.eq.s32.totalorder %s21, 0
      %p83 = por %p81, %p82
      %s84 = ssub.s32 %s22, %s34
      %s85 = ssub.s32 %s23, %s30
      %s86 = sor.u32 %s84, %s85
      %p87 = scmp.eq.s32.totalorder %s86, 0
      %s89 = sadd.s32 %s88, 1
      %s90 = scalar_select %p87, %s88, %s89
      %p93 = pneg %p87
      %p94 = scmp.eq.s32.totalorder %s15, 1
      %p95 = por %p93, %p94
      %p96 = scmp.ne.s32.totalorder %s88, %s91
      %p97 = scmp.eq.s32.totalorder %s15, 0
      %p98 = por %p96, %p97
      %p99 = scmp.ne.s32.totalorder %s88, %s91
      %p100 = scmp.eq.s32.totalorder %s20, 1
      %p101 = por %p99, %p100
      %p102 = scmp.ne.s32.totalorder %s91, %s92
      %p103 = scmp.eq.s32.totalorder %s20, 0
      %p104 = por %p102, %p103
      %p105 = scmp.ne.s32.totalorder %s91, %s92
      %p106 = scmp.eq.s32.totalorder %s21, 1
      %p107 = por %p105, %p106
      %p109 = scmp.ne.s32.totalorder %s92, %s108
      %p110 = scmp.eq.s32.totalorder %s21, 0
      %p111 = por %p109, %p110
      %p112 = scmp.le.s32.totalorder 1, %s15
      %p113 = scmp.lt.s32.totalorder %s15, 3
      %p114 = pnand %p112, %p113
      %p115 = pneg %p114
      // Predicated region
      $region9: #{tpu_custom_call.1} parent=5 // pred_check
        _
      $region10: #{tpu_custom_call.1} parent=5 // pred_check_branch
        %117 = sbr.rel (%p114) target = $region12
      $region11: #{tpu_custom_call.1} parent=5 // pred_region
        %s118 = ssub.s32 %s15, 1
        // Predicated region
        $region13: #{tpu_custom_call.1} parent=11 // pred_check
          %p119 = pneg %p76
        $region14: #{tpu_custom_call.1} parent=11 // pred_check_branch
          %121 = sbr.rel (%p119) target = $region16
        $region15: #{tpu_custom_call.1} parent=11 // pred_region
          %123 = vsyncadd [#allocation6], 0
          %s125 = sshll.u32 %s1, 4
          %s126 = int_to_ptr.hbm [resolvable:$true] %s125
          %s127 = sshll.u32 [#allocation5], 4
          %s128 = int_to_ptr.vmem [resolvable:$true] %s127
          %130 = dma.hbm_to_vmem [thread:$0]  %s126, 64, %s128, [#allocation6]
        $region16: #{tpu_custom_call.1} parent=11 // pred_fallthru
          _
      $region12: #{tpu_custom_call.1} parent=5 // pred_fallthru
        _
      %p131 = scmp.lt.s32.totalorder %s15, 2
      // Predicated region
      $region17: #{tpu_custom_call.1} parent=5 // pred_check
        %p132 = pneg %p131
      $region18: #{tpu_custom_call.1} parent=5 // pred_check_branch
        %134 = sbr.rel (%p132) target = $region20
      $region19: #{tpu_custom_call.1} parent=5 // pred_region
        // Predicated region
        $region21: #{tpu_custom_call.1} parent=19 // pred_check
          %p135 = pneg %p49
        $region22: #{tpu_custom_call.1} parent=19 // pred_check_branch
          %137 = sbr.rel (%p135) target = $region24
        $region23: #{tpu_custom_call.1} parent=19 // pred_region
          %s138 = sand.u32 %s39, 1
          %s139 = scalar_lea.sflag [#allocation3], %s138
          %s140 = sand.u32 %s39, 1
          %s141 = smul.addr %s140, 16
          %s142 = scalar_lea.vmem [#allocation2], %s141
          %s143 = smul.u32 2, %s23
          %145 = vsyncadd %s139, 0
          %s146 = smul.addr %s22, 2
          %s147 = sadd.s32 %s143, %s146
          %s148 = smul.addr %s147, 8
          %s149 = scalar_lea.hbm %s0, %s148
          %s151 = sshll.u32 %s149, 4
          %s152 = int_to_ptr.hbm [resolvable:$true] %s151
          %s153 = sshll.u32 %s142, 4
          %s154 = int_to_ptr.vmem [resolvable:$true] %s153
          %156 = dma.hbm_to_vmem [thread:$0]  %s152, 256, %s154, %s139
        $region24: #{tpu_custom_call.1} parent=19 // pred_fallthru
          _
      $region20: #{tpu_custom_call.1} parent=5 // pred_fallthru
        _
      %p157 = scmp.le.s32.totalorder 1, %s15
      %p158 = scmp.lt.s32.totalorder %s15, 3
      %p159 = pnand %p157, %p158
      %p160 = pneg %p159
      // Predicated region
      $region25: #{tpu_custom_call.1} parent=5 // pred_check
        _
      $region26: #{tpu_custom_call.1} parent=5 // pred_check_branch
        %162 = sbr.rel (%p159) target = $region28
      $region27: #{tpu_custom_call.1} parent=5 // pred_region
        %s163 = ssub.s32 %s15, 1
        %s164 = sand.u32 %s42, 1
        %s165 = scalar_lea.sflag [#allocation3], %s164
        %s166 = sand.u32 %s42, 1
        %s167 = smul.addr %s166, 16
        %s168 = scalar_lea.vmem [#allocation2], %s167
        // Predicated region
        $region29: #{tpu_custom_call.1} parent=27 // pred_check
          %p169 = pneg %p55
        $region30: #{tpu_custom_call.1} parent=27 // pred_check_branch
          %171 = sbr.rel (%p169) target = $region32
        $region31: #{tpu_custom_call.1} parent=27 // pred_region
          %173 = dma.done %s165, 256
        $region32: #{tpu_custom_call.1} parent=27 // pred_fallthru
          _
        // Predicated region
        $region33: #{tpu_custom_call.1} parent=27 // pred_check
          %p174 = pneg %p76
        $region34: #{tpu_custom_call.1} parent=27 // pred_check_branch
          %176 = sbr.rel (%p174) target = $region36
        $region35: #{tpu_custom_call.1} parent=27 // pred_region
          %178 = dma.done [#allocation6], 64
        $region36: #{tpu_custom_call.1} parent=27 // pred_fallthru
          _
        %s179 = sand.u32 %s42, 1
        %s180 = scalar_lea.sflag [#allocation3], %s179
        %s181 = sand.u32 %s42, 1
        %s182 = smul.addr %s181, 16
        %s183 = scalar_lea.vmem [#allocation2], %s182
        %p184 = pneg %p55
        %p185 = pneg %p52
        %p186 = pneg %p76
        %p187 = pneg %p73
        %p188 = pneg %p104
        %p189 = pneg %p101
        %s190 = sand.u32 %s91, 1
        %s191 = scalar_lea.sflag [#allocation4], %s190
        %s192 = sand.u32 %s91, 1
        %s193 = smul.addr %s192, 8
        %s194 = scalar_lea.vmem [#allocation7], %s193
        %s195 = smul.u32 2, %s25
        %s196 = smul.u32 2, %s25
        %v197 = vld [vmem:[#allocation5] sm:$0xf]
        %v198 = vld [vmem:[%s168] sm:$0xff]
        %v199 = vld [vmem:[%s168 + $0x8] sm:$0xff]
        %vm200 = vcmask 64512
        %v202 = vsel %vm200, %v197, 0
        %204 = vmatpush.msra.mxu0 0.0
        %205 = vmatpush.msra.mxu0 0.0
        %206 = vmatpush.msra.mxu0 0.0
        %207 = vmatpush.msra.mxu0 0.0
        %208 = vmatpush.msra.mxu0 0.0
        %209 = vmatpush.msra.mxu0 0.0
        %210 = vmatpush.msra.mxu0 0.0
        %211 = vmatpush.msra.mxu0 0.0
        %212 = vmatpush.msra.mxu0 0.0
        %213 = vmatpush.msra.mxu0 0.0
        %214 = vmatpush.msra.mxu0 0.0
        %215 = vmatpush.msra.mxu0 0.0
        %216 = vmatpush.msra.mxu0 0.0
        %217 = vmatpush.msra.mxu0 0.0
        %218 = vmatpush.msra.mxu0 0.0
        %219 = vmatpush.msra.mxu0 %v198
        %220 = vmatmul.f32.gmra.mxu0 %v202
        %v221 = vpop.f32.mrf.mxu0
        %v222 = vadd.f32 0.0, %v221
        %223 = vdwg.mxu0
        %224 = vmatpush.msra.mxu0 0.0
        %225 = vmatpush.msra.mxu0 0.0
        %226 = vmatpush.msra.mxu0 0.0
        %227 = vmatpush.msra.mxu0 0.0
        %228 = vmatpush.msra.mxu0 0.0
        %229 = vmatpush.msra.mxu0 0.0
        %230 = vmatpush.msra.mxu0 0.0
        %231 = vmatpush.msra.mxu0 0.0
        %232 = vmatpush.msra.mxu0 0.0
        %233 = vmatpush.msra.mxu0 0.0
        %234 = vmatpush.msra.mxu0 0.0
        %235 = vmatpush.msra.mxu0 0.0
        %236 = vmatpush.msra.mxu0 0.0
        %237 = vmatpush.msra.mxu0 0.0
        %238 = vmatpush.msra.mxu0 0.0
        %239 = vmatpush.msra.mxu0 %v199
        %240 = vmatmul.f32.gmra.mxu0 %v202
        %v241 = vpop.f32.mrf.mxu0
        %v242 = vadd.f32 0.0, %v241
        %243 = vdwg.mxu0
        %v246 = vrot.slane %v242, 4
        %vm247 = vcmask 1043456
        %v248 = vsel %vm247, %v222, %v246
        %250 = vst [vmem:[%s194] sm:$0xff] %v248
        %s251 = sand.u32 %s91, 1
        %s252 = scalar_lea.sflag [#allocation4], %s251
        %s253 = sand.u32 %s91, 1
        %s254 = smul.addr %s253, 8
        %s255 = scalar_lea.vmem [#allocation7], %s254
        // Predicated region
        $region37: #{tpu_custom_call.1} parent=27 // pred_check
          %p256 = pneg %p101
        $region38: #{tpu_custom_call.1} parent=27 // pred_check_branch
          %258 = sbr.rel (%p256) target = $region40
        $region39: #{tpu_custom_call.1} parent=27 // pred_region
          %s259 = smul.u32 2, %s25
          %261 = vsyncadd %s252, 0
          %s262 = smul.addr %s24, 2
          %s263 = sadd.s32 %s259, %s262
          %s264 = smul.addr %s263, 4
          %s265 = scalar_lea.hbm %s2, %s264
          %s267 = sshll.u32 %s255, 4
          %s268 = int_to_ptr.vmem [resolvable:$true] %s267
          %s269 = sshll.u32 %s265, 4
          %s270 = int_to_ptr.hbm [resolvable:$true] %s269
          %272 = dma.vmem_to_hbm [thread:$0]  %s268, 128, %s270, %s252
        $region40: #{tpu_custom_call.1} parent=27 // pred_fallthru
          _
      $region28: #{tpu_custom_call.1} parent=5 // pred_fallthru
        _
      %p273 = scmp.le.s32.totalorder 2, %s15
      // Predicated region
      $region41: #{tpu_custom_call.1} parent=5 // pred_check
        %p274 = pneg %p273
      $region42: #{tpu_custom_call.1} parent=5 // pred_check_branch
        %276 = sbr.rel (%p274) target = $region44
      $region43: #{tpu_custom_call.1} parent=5 // pred_region
        %s277 = ssub.s32 %s15, 2
        // Predicated region
        $region45: #{tpu_custom_call.1} parent=43 // pred_check
          %p278 = pneg %p107
        $region46: #{tpu_custom_call.1} parent=43 // pred_check_branch
          %280 = sbr.rel (%p278) target = $region48
        $region47: #{tpu_custom_call.1} parent=43 // pred_region
          %s281 = sand.u32 %s92, 1
          %s282 = scalar_lea.sflag [#allocation4], %s281
          %s283 = sand.u32 %s92, 1
          %s284 = smul.addr %s283, 8
          %s285 = scalar_lea.vmem [#allocation7], %s284
          %287 = dma.done %s282, 128
        $region48: #{tpu_custom_call.1} parent=43 // pred_fallthru
          _
      $region44: #{tpu_custom_call.1} parent=5 // pred_fallthru
        _
    $region6: #{tpu_custom_call.1} parent=1 // loop_footer
      %s19 = sadd.s32 1, %s15
    $region7: #{tpu_custom_call.1} parent=1 // loop_footer_branch
      %14 = sbr.rel target = $region3
    $region8: #{tpu_custom_call.1} parent=1 // loop_exit
      _
    %288 = vsyncpa [#allocation3], 1
    %s289 = scalar_lea.sflag [#allocation3], 1
    %290 = vsyncpa %s289, 1
    %291 = vsyncpa [#allocation6], 1
    %292 = vsyncpa [#allocation4], 1
    %s293 = scalar_lea.sflag [#allocation4], 1
    %294 = vsyncpa %s293, 1

</llo_original>
